<compile_context>
chip_gen: v6e
topology: v6e:2x2x1
jax: 0.10.0
libtpu: 0.0.40
codegen_flags: <defaults>
</compile_context>

<pallas_src>
import functools

import jax
import jax.numpy as jnp
from jax import lax
from jax.experimental import pallas as pl
from jax.experimental.pallas import tpu as pltpu


# Default bytes per embedding block: 2x double-buffered blocks + mask/out/scratch
# stay well under 48 MiB, which fits every generation (incl. v7x's 64 MiB VMEM).
_DEFAULT_BLOCK_BUDGET = 8 * 1024 * 1024


# ---------------------------------------------------------------------------
# Kernels (accumulate over the sequence-tile grid axis, which is last)
# ---------------------------------------------------------------------------
def _mean_pool_kernel(emb_ref, mask_ref, inv_ref, out_ref, acc_ref, *, precision):
    # emb_ref : (TB, TS, TH)  activations, native dtype
    # mask_ref: (TB, 1, TS)   mask in activation dtype (TS on lanes = matmul lhs)
    # inv_ref : (TB, 1, 1)    f32 1/clamp(sum(mask),1e-9), hoisted to the wrapper
    # out_ref : (TB, 1, TH)
    # acc_ref : (TB, 1, TH)   f32 scratch, resident across the S grid axis
    k = pl.program_id(2)

    @pl.when(k == 0)
    def _():
        acc_ref[...] = jnp.zeros_like(acc_ref)

    # Masked sum over the sequence tile on the MXU: (TB,1,TS)x(TB,TS,TH)->(TB,1,TH)
    acc_ref[...] += jnp.einsum(
        "bqs,bsh->bqh", mask_ref[...], emb_ref[...],
        preferred_element_type=jnp.float32, precision=precision)

    @pl.when(k == pl.num_programs(2) - 1)
    def _():
        out_ref[...] = (acc_ref[...] * inv_ref[...]).astype(out_ref.dtype)


def _max_pool_kernel(emb_ref, mask_ref, out_ref, acc_ref):
    # emb_ref : (TB, TS, TH)  activations, native dtype (max is exact in bf16)
    # mask_ref: (TB, TS, 1)   mask in activation dtype; broadcast = lane splat
    # out_ref : (TB, TH)
    # acc_ref : (TB, TH)      scratch in the native dtype
    k = pl.program_id(2)
    neg = jnp.asarray(-1.0e9, dtype=acc_ref.dtype)

    @pl.when(k == 0)
    def _():
        acc_ref[...] = jnp.full_like(acc_ref, neg)

    masked = jnp.where(mask_ref[...] == 0, neg, emb_ref[...])
    acc_ref[...] = jnp.maximum(acc_ref[...], jnp.max(masked, axis=1))

    @pl.when(k == pl.num_programs(2) - 1)
    def _():
        out_ref[...] = acc_ref[...]


# ---------------------------------------------------------------------------
# Tiling helpers
# ---------------------------------------------------------------------------
def _largest_aligned_divisor(dim, unit, cap):
    """Largest multiple of `unit` that divides `dim` and is <= cap (>= unit)."""
    best = unit
    t = unit
    while t <= min(dim, cap):
        if dim % t == 0:
            best = t
        t += unit
    return best


def _round_up(x, m):
    return ((x + m - 1) // m) * m


# ---------------------------------------------------------------------------
# Wrapper (the `Encoder.forward` equivalent, given last_hidden_state)
# ---------------------------------------------------------------------------
@functools.partial(jax.jit, static_argnames=("pooling", "block_budget_bytes"))
def encoder_forward(last_hidden_state, attention_mask, *, pooling="mean",
                    block_budget_bytes=_DEFAULT_BLOCK_BUDGET):
    """Pooling stage of Encoder.forward, given the HF encoder's output."""
    if pooling == "cls":
        return last_hidden_state[:, 0, :]          # pure slice, no kernel needed
    if pooling not in ("mean", "max"):
        raise ValueError(f"Invalid pooling: {pooling}")

    emb = last_hidden_state
    B, S, H = emb.shape
    dtype = emb.dtype
    itemsize = jnp.dtype(dtype).itemsize
    mask = attention_mask.astype(dtype)            # cast once, in activation dtype

    # --- batch tile ---------------------------------------------------------
    if B % 8 == 0:
        TB = 8
    elif B <= 8:
        TB = B                                     # small batch: full-extent block
    else:
        # Rare fallback: pad batch up to a multiple of 8 with zero-mask rows
        # (sliced off below) rather than letting a full-B block blow up VMEM.
        Bpad = _round_up(B, 8)
        emb = jnp.pad(emb, ((0, Bpad - B), (0, 0), (0, 0)))
        mask = jnp.pad(mask, ((0, Bpad - B), (0, 0)))
        TB = 8
    Bp = emb.shape[0]
    nb = Bp // TB

    # --- hidden tile ----------------------------------------------------------
    if H % 128 == 0:
        # Cap at 512 when there is only one batch tile so the H axis still gives
        # >=2 "parallel" blocks (two v7x TensorCores); 1024 otherwise.  Also cap
        # by the VMEM budget so TS=128 always fits.
        cap = 512 if nb == 1 else 1024
        cap = min(cap, max(128, block_budget_bytes // (TB * 128 * itemsize)))
        TH = _largest_aligned_divisor(H, 128, cap)
    else:
        TH = H                                     # full-extent last dim is allowed
    nh = H // TH

    # --- sequence tile --------------------------------------------------------
    if S % 128 == 0:
        cap = max(128, block_budget_bytes // (TB * TH * itemsize))
        TS = _largest_aligned_divisor(S, 128, cap)
    elif TB * S * TH * itemsize <= 2 * block_budget_bytes:
        TS = S                                     # full-extent block still fits
    else:
        # Last resort for large, non-128-divisible S: zero-mask pad (one extra
        # HBM pass, but keeps the pipeline instead of a VMEM-busting slab).
        Spad = _round_up(S, 128)
        emb = jnp.pad(emb, ((0, 0), (0, Spad - S), (0, 0)))
        mask = jnp.pad(mask, ((0, 0), (0, Spad - S)))
        cap = max(128, block_budget_bytes // (TB * TH * itemsize))
        TS = _largest_aligned_divisor(Spad, 128, cap)
    Sp = emb.shape[1]
    ns = Sp // TS

    grid = (nb, nh, ns)                            # reduction (S) axis last
    compiler_params = pltpu.CompilerParams(
        dimension_semantics=("parallel", "parallel", "arbitrary"),
        vmem_limit_bytes=min(max(48 * 1024 * 1024, 3 * block_budget_bytes),
                             100 * 1024 * 1024),
    )
    emb_spec = pl.BlockSpec((TB, TS, TH), lambda i, h, k: (i, k, h))

    if pooling == "mean":
        # Denominator hoisted out of the kernel (tiny (B,)-sized reduce).
        cnt = jnp.sum(mask.astype(jnp.float32), axis=1)             # (Bp,)
        inv = (1.0 / jnp.maximum(cnt, 1e-9)).reshape(Bp, 1, 1)       # f32 (Bp,1,1)
        mask3 = mask[:, None, :]                                     # (Bp,1,Sp), free
        precision = (lax.Precision.HIGHEST if dtype == jnp.float32 else None)
        out = pl.pallas_call(
            functools.partial(_mean_pool_kernel, precision=precision),
            out_shape=jax.ShapeDtypeStruct((Bp, 1, H), dtype),
            grid_spec=pltpu.PrefetchScalarGridSpec(
                num_scalar_prefetch=0,
                grid=grid,
                in_specs=[
                    emb_spec,
                    pl.BlockSpec((TB, 1, TS), lambda i, h, k: (i, 0, k)),
                    pl.BlockSpec((TB, 1, 1), lambda i, h, k: (i, 0, 0)),
                ],
                out_specs=pl.BlockSpec((TB, 1, TH), lambda i, h, k: (i, 0, h)),
                scratch_shapes=[pltpu.VMEM((TB, 1, TH), jnp.float32)],
            ),
            compiler_params=compiler_params,
        )(emb, mask3, inv)
        out = out[:, 0, :]
    else:  # max
        mask3 = mask[:, :, None]                                     # (Bp,Sp,1), free
        out = pl.pallas_call(
            _max_pool_kernel,
            out_shape=jax.ShapeDtypeStruct((Bp, H), dtype),
            grid_spec=pltpu.PrefetchScalarGridSpec(
                num_scalar_prefetch=0,
                grid=grid,
                in_specs=[
                    emb_spec,
                    pl.BlockSpec((TB, TS, 1), lambda i, h, k: (i, k, 0)),
                ],
                out_specs=pl.BlockSpec((TB, TH), lambda i, h, k: (i, h)),
                scratch_shapes=[pltpu.VMEM((TB, TH), dtype)],
            ),
            compiler_params=compiler_params,
        )(emb, mask3)

    return out[:B] if out.shape[0] != B else out


# ---------------------------------------------------------------------------
# Pure-JAX reference (mirrors the PyTorch code) for verification
# ---------------------------------------------------------------------------
def _ref_forward(last_hidden_state, attention_mask, pooling):
    m = attention_mask[:, :, None].astype(jnp.float32)
    if pooling == "mean":
        return jnp.sum(last_hidden_state * m, axis=1) / jnp.maximum(
            jnp.sum(m, axis=1), 1e-9)
    if pooling == "max":
        masked = jnp.where(m == 0.0, -1.0e9, last_hidden_state)
        return jnp.max(masked, axis=1)
    if pooling == "cls":
        return last_hidden_state[:, 0, :]
    raise ValueError(pooling)


if __name__ == "__main__":
    key = jax.random.PRNGKey(0)
    ok = True

    # TODO(synk): the wrapped HuggingFace encoder (self.encoder) is an external
    # black box; its `last_hidden_state` output is synthesized deterministically.

    # (B, S, H, block_budget_bytes):
    #   1) tiny, non-128-aligned dims -> full-extent blocks, single grid step
    #   2) small VMEM budget override -> grid (1,2,2): H tiling + S accumulation
    #   3) non-multiple-of-8 batch    -> padded-B fallback path
    test_cases = (
        (2, 8, 32, None),
        (8, 256, 256, 128 * 1024),
        (10, 128, 64, None),
    )
    for (B, S, H, budget) in test_cases:
        k_enc, k_len, key = jax.random.split(key, 3)
        last_hidden_state = jax.random.normal(k_enc, (B, S, H), dtype=jnp.float32)
        lengths = jax.random.randint(k_len, (B,), 1, S + 1, dtype=jnp.int32)
        attention_mask = (jnp.arange(S, dtype=jnp.int32)[None, :]
                          < lengths[:, None]).astype(jnp.int32)

        for pooling in ("mean", "max", "cls"):
            kwargs = {} if budget is None else {"block_budget_bytes": budget}
            out = encoder_forward(last_hidden_state, attention_mask,
                                  pooling=pooling, **kwargs)
            out = jax.block_until_ready(out)
            ref = _ref_forward(last_hidden_state, attention_mask, pooling)
            if not jnp.allclose(out, ref, atol=2e-5, rtol=2e-5):
                ok = False
                err = jnp.max(jnp.abs(out - ref))
                print(f"MISMATCH shape={(B, S, H)} pooling={pooling} "
                      f"max_err={err:.3e}")

    if ok:
        print("KERNEL_OK")
</pallas_src>

<mosaic_0001>
module attributes {stable_mosaic.version = 11 : i64} {
  func.func @_mean_pool_kernel(%arg0: i32, %arg1: i32, %arg2: i32, %arg3: memref<2x8x32xf32, #tpu.memory_space<vmem>>, %arg4: memref<2x1x8xf32, #tpu.memory_space<vmem>>, %arg5: memref<2x1x1xf32, #tpu.memory_space<vmem>>, %arg6: memref<2x1x32xf32, #tpu.memory_space<vmem>>, %arg7: memref<2x1x32xf32, #tpu.memory_space<vmem>>) attributes {dimension_semantics = [#tpu.dimension_semantics<parallel>, #tpu.dimension_semantics<parallel>, #tpu.dimension_semantics<arbitrary>], iteration_bounds = array<i64: 1, 1, 1>, scalar_prefetch = 0 : i64, scratch_operands = 1 : i64, tpu.core_type = #tpu.core_type<tc>, window_params = [{transform_indices = @transform_0, window_bounds = array<i64: 2, 8, 32>}, {transform_indices = @transform_1, window_bounds = array<i64: 2, 1, 8>}, {transform_indices = @transform_2, window_bounds = array<i64: 2, 1, 1>}, {transform_indices = @transform_3, window_bounds = array<i64: 2, 1, 32>}]} {
    %c0_i32 = arith.constant 0 : i32
    %0 = arith.cmpi eq, %arg2, %c0_i32 : i32
    %1 = arith.extui %0 : i1 to i32
    %c0_i32_0 = arith.constant 0 : i32
    %2 = arith.cmpi ne, %1, %c0_i32_0 : i32
    scf.if %2 {
      %cst_14 = arith.constant 0.000000e+00 : f32
      %12 = vector.broadcast %cst_14 : f32 to vector<2x1x32xf32>
      %c0_15 = arith.constant 0 : index
      %c0_16 = arith.constant 0 : index
      %c0_17 = arith.constant 0 : index
      %13 = vector.load %arg7[%c0_15, %c0_16, %c0_17] : memref<2x1x32xf32, #tpu.memory_space<vmem>>, vector<2x1x32xf32>
      tpu.vector_store %arg7[%c0_15, %c0_16, %c0_17], %12 {strides = array<i32>} : memref<2x1x32xf32, #tpu.memory_space<vmem>>, vector<2x1x32xf32>,
    } else {
    }
    %c0 = arith.constant 0 : index
    %c0_1 = arith.constant 0 : index
    %c0_2 = arith.constant 0 : index
    %3 = vector.load %arg7[%c0, %c0_1, %c0_2] : memref<2x1x32xf32, #tpu.memory_space<vmem>>, vector<2x1x32xf32>
    %c0_3 = arith.constant 0 : index
    %c0_4 = arith.constant 0 : index
    %c0_5 = arith.constant 0 : index
    %4 = vector.load %arg4[%c0_3, %c0_4, %c0_5] : memref<2x1x8xf32, #tpu.memory_space<vmem>>, vector<2x1x8xf32>
    %c0_6 = arith.constant 0 : index
    %c0_7 = arith.constant 0 : index
    %c0_8 = arith.constant 0 : index
    %5 = vector.load %arg3[%c0_6, %c0_7, %c0_8] : memref<2x8x32xf32, #tpu.memory_space<vmem>>, vector<2x8x32xf32>
    "tpu.trace_start"() <{level = 10 : i32, message = "bqs,bsh->bqh"}> : () -> ()
    %cst = arith.constant dense<0.000000e+00> : vector<2x1x32xf32>
    %6 = tpu.matmul %4, %5, %cst {dimension_numbers = #tpu.dot_dimension_numbers<[2], [1], [1], [2], [0, 0, 0, 1, 1, 2], [0], [0]>, precision = #tpu.contract_precision<fp32>} : vector<2x1x8xf32>, vector<2x8x32xf32>, vector<2x1x32xf32> -> vector<2x1x32xf32>
    "tpu.trace_stop"() : () -> ()
    %7 = arith.addf %3, %6 : vector<2x1x32xf32>
    %c0_9 = arith.constant 0 : index
    %c0_10 = arith.constant 0 : index
    %c0_11 = arith.constant 0 : index
    %8 = vector.load %arg7[%c0_9, %c0_10, %c0_11] : memref<2x1x32xf32, #tpu.memory_space<vmem>>, vector<2x1x32xf32>
    tpu.vector_store %arg7[%c0_9, %c0_10, %c0_11], %7 {strides = array<i32>} : memref<2x1x32xf32, #tpu.memory_space<vmem>>, vector<2x1x32xf32>,
    %c0_i32_12 = arith.constant 0 : i32
    %9 = arith.cmpi eq, %arg2, %c0_i32_12 : i32
    %10 = arith.extui %9 : i1 to i32
    %c0_i32_13 = arith.constant 0 : i32
    %11 = arith.cmpi ne, %10, %c0_i32_13 : i32
    scf.if %11 {
      %c0_14 = arith.constant 0 : index
      %c0_15 = arith.constant 0 : index
      %c0_16 = arith.constant 0 : index
      %12 = vector.load %arg7[%c0_14, %c0_15, %c0_16] : memref<2x1x32xf32, #tpu.memory_space<vmem>>, vector<2x1x32xf32>
      %c0_17 = arith.constant 0 : index
      %c0_18 = arith.constant 0 : index
      %c0_19 = arith.constant 0 : index
      %13 = vector.load %arg5[%c0_17, %c0_18, %c0_19] : memref<2x1x1xf32, #tpu.memory_space<vmem>>, vector<2x1x1xf32>
      %14 = vector.broadcast %13 : vector<2x1x1xf32> to vector<2x1x32xf32>
      %15 = arith.mulf %12, %14 : vector<2x1x32xf32>
      %c0_20 = arith.constant 0 : index
      %c0_21 = arith.constant 0 : index
      %c0_22 = arith.constant 0 : index
      %16 = vector.load %arg6[%c0_20, %c0_21, %c0_22] : memref<2x1x32xf32, #tpu.memory_space<vmem>>, vector<2x1x32xf32>
      tpu.vector_store %arg6[%c0_20, %c0_21, %c0_22], %15 {strides = array<i32>} : memref<2x1x32xf32, #tpu.memory_space<vmem>>, vector<2x1x32xf32>,
    } else {
    }
    return
  }
  func.func @transform_0(%arg0: i32, %arg1: i32, %arg2: i32) -> (i32, i32, i32) {
    %c0_i32 = arith.constant 0 : i32
    return %arg0, %arg2, %arg1 : i32, i32, i32
  }
  func.func @transform_1(%arg0: i32, %arg1: i32, %arg2: i32) -> (i32, i32, i32) {
    %c0_i32 = arith.constant 0 : i32
    %c0_i32_0 = arith.constant 0 : i32
    return %arg0, %c0_i32, %arg2 : i32, i32, i32
  }
  func.func @transform_2(%arg0: i32, %arg1: i32, %arg2: i32) -> (i32, i32, i32) {
    %c0_i32 = arith.constant 0 : i32
    %c0_i32_0 = arith.constant 0 : i32
    %c0_i32_1 = arith.constant 0 : i32
    return %arg0, %c0_i32, %c0_i32_0 : i32, i32, i32
  }
  func.func @transform_3(%arg0: i32, %arg1: i32, %arg2: i32) -> (i32, i32, i32) {
    %c0_i32 = arith.constant 0 : i32
    %c0_i32_0 = arith.constant 0 : i32
    return %arg0, %c0_i32, %arg1 : i32, i32, i32
  }
}

</mosaic_0001>

<llo_original>
// kernel: encoder_forward.1
$region0: #{encoder_forward.1}
  #allocation0 [shape = 'u32[]', space=smem, size = 0x4, offset = 0x4, fixed_abs, tag = 'smem constant byte address 0x4 - core index']
  #allocation1 [shape = 'u32[144,128]{1,0:T(1,128)}', space=vmem, size = 0x12000, scoped, tag = 'internal scratch']
  #allocation2 [shape = 'f32[2,1,32]{2,1,0:T(1,128)}', space=vmem, size = 0x400, scoped, tag = 'scratch operand']
  %s0 = inlined_call_operand.hbm [shape: f32[2,8,32], index: 0, kind: input, shape index: {}]
  %s1 = inlined_call_operand.vmem [shape: f32[2,1,8], index: 1, kind: input, shape index: {}]
  %s2 = inlined_call_operand.vmem [shape: f32[2,1,1], index: 2, kind: input, shape index: {}]
  %s3 = inlined_call_operand.hbm [shape: f32[2,1,32], index: 3, kind: output, shape index: {}]
  %s4 = sld [smem:[#allocation0]]
  $region34: #{encoder_forward.1} parent=0
    _
  %s6 = ssub.s32 1, %s4
  %s7 = scalar_select 0, %s6, %s4
  $region1: #{encoder_forward.1} parent=0
    #allocation3 [shape = 'u8[8192]{0}', space=vmem, size = 0x2000, scoped, tag = 'input window, operand 0, single buffered']
    #allocation4 [shape = 's32[1]{0}', space=sflag, size = 0x4, scoped, tag = 'scoped memory for encoder_forward.1']
    #allocation5 [shape = 's32[1]{0}', space=sflag, size = 0x4, scoped, tag = 'scoped memory for encoder_forward.1']
    #allocation6 [shape = 'u8[1024]{0}', space=vmem, size = 0x400, scoped, tag = 'output window, operand 0, single buffered']
    %8 = vsyncpa [#allocation4], 0
    %9 = vsyncpa [#allocation5], 0
    // Predicated region
    $region2: #{encoder_forward.1} parent=1 // pred_check
      _
    $region3: #{encoder_forward.1} parent=1 // pred_check_branch
      %11 = sbr.rel (0) target = $region5
    $region4: #{encoder_forward.1} parent=1 // pred_region
      %s13 = ssub.s32 256, 256
      %14 = vsyncadd [#allocation4], %s13
      %s15 = sshll.u32 [#allocation3], 4
      %s16 = int_to_ptr.vmem [resolvable:$true] %s15
      %21 = dma.hbm_to_vmem [thread:$0]  %s0, 256, %s16, [#allocation4], 128, 128, 8
    $region5: #{encoder_forward.1} parent=1 // pred_fallthru
      _
    // Predicated region
    $region6: #{encoder_forward.1} parent=1 // pred_check
      _
    $region7: #{encoder_forward.1} parent=1 // pred_check_branch
      %23 = sbr.rel (0) target = $region9
    $region8: #{encoder_forward.1} parent=1 // pred_region
      _
    $region9: #{encoder_forward.1} parent=1 // pred_fallthru
      _
    // Predicated region
    $region10: #{encoder_forward.1} parent=1 // pred_check
      _
    $region11: #{encoder_forward.1} parent=1 // pred_check_branch
      %25 = sbr.rel (0) target = $region13
    $region12: #{encoder_forward.1} parent=1 // pred_region
      _
    $region13: #{encoder_forward.1} parent=1 // pred_fallthru
      _
    // Predicated region
    $region14: #{encoder_forward.1} parent=1 // pred_check
      _
    $region15: #{encoder_forward.1} parent=1 // pred_check_branch
      %27 = sbr.rel (0) target = $region17
    $region16: #{encoder_forward.1} parent=1 // pred_region
      %28 = dma.done [#allocation4], 256
    $region17: #{encoder_forward.1} parent=1 // pred_fallthru
      _
    %p29 = scmp.eq.s32.totalorder 0, 0
    // Predicated region
    $region18: #{encoder_forward.1} parent=1 // pred_check
      %p30 = pneg %p29
    $region19: #{encoder_forward.1} parent=1 // pred_check_branch
      %32 = sbr.rel (%p30) target = $region21
    $region20: #{encoder_forward.1} parent=1 // pred_region
      %vm33 = vcmask 253952
      %34 = vst.msk [vmem:[#allocation2] sm:$0x1] %vm33, 0.0
      %35 = vst.msk [vmem:[#allocation2 + $0x1] sm:$0x1] %vm33, 0.0
    $region21: #{encoder_forward.1} parent=1 // pred_fallthru
      _
    %v36 = vld [vmem:[#allocation2] sm:$0x1]
    %v37 = vld [vmem:[#allocation2 + $0x1] sm:$0x1]
    %v38 = vld [vmem:[%s1] sm:$0x1]
    %v39 = vld [vmem:[%s1 + $0x1] sm:$0x1]
    %v40 = vld [vmem:[#allocation3] sm:$0xff]
    %v41 = vld [vmem:[#allocation3 + $0x8] sm:$0xff]
    %vm42 = vcmask 64512
    %v44 = vsel %vm42, %v38, 0
    %46 = vmatprep.subr.mxu0 0.0
    %47 = vmatpush1.msra.mxu0 0.0
    %48 = vmatprep.subr.mxu0 0.0
    %49 = vmatpush1.msra.mxu0 0.0
    %50 = vmatprep.subr.mxu0 0.0
    %51 = vmatpush1.msra.mxu0 0.0
    %52 = vmatprep.subr.mxu0 0.0
    %53 = vmatpush1.msra.mxu0 0.0
    %54 = vmatprep.subr.mxu0 0.0
    %55 = vmatpush1.msra.mxu0 0.0
    %56 = vmatprep.subr.mxu0 0.0
    %57 = vmatpush1.msra.mxu0 0.0
    %58 = vmatprep.subr.mxu0 0.0
    %59 = vmatpush1.msra.mxu0 0.0
    %60 = vmatprep.subr.mxu0 0.0
    %61 = vmatpush1.msra.mxu0 0.0
    %62 = vmatprep.subr.mxu0 0.0
    %63 = vmatpush1.msra.mxu0 0.0
    %64 = vmatprep.subr.mxu0 0.0
    %65 = vmatpush1.msra.mxu0 0.0
    %66 = vmatprep.subr.mxu0 0.0
    %67 = vmatpush1.msra.mxu0 0.0
    %68 = vmatprep.subr.mxu0 0.0
    %69 = vmatpush1.msra.mxu0 0.0
    %70 = vmatprep.subr.mxu0 0.0
    %71 = vmatpush1.msra.mxu0 0.0
    %72 = vmatprep.subr.mxu0 0.0
    %73 = vmatpush1.msra.mxu0 0.0
    %74 = vmatprep.subr.mxu0 0.0
    %75 = vmatpush1.msra.mxu0 0.0
    %76 = vmatprep.subr.mxu0 0.0
    %v77 = vand.u32 %v40, 4294901760
    %78 = vmatpush1.msra.mxu0 %v77
    %79 = vmatprep.subr.mxu0 0.0
    %80 = vmatpush2.msra.mxu0 0.0
    %81 = vmatprep.subr.mxu0 0.0
    %82 = vmatpush2.msra.mxu0 0.0
    %83 = vmatprep.subr.mxu0 0.0
    %84 = vmatpush2.msra.mxu0 0.0
    %85 = vmatprep.subr.mxu0 0.0
    %86 = vmatpush2.msra.mxu0 0.0
    %87 = vmatprep.subr.mxu0 0.0
    %88 = vmatpush2.msra.mxu0 0.0
    %89 = vmatprep.subr.mxu0 0.0
    %90 = vmatpush2.msra.mxu0 0.0
    %91 = vmatprep.subr.mxu0 0.0
    %92 = vmatpush2.msra.mxu0 0.0
    %93 = vmatprep.subr.mxu0 0.0
    %94 = vmatpush2.msra.mxu0 0.0
    %95 = vmatprep.subr.mxu0 0.0
    %96 = vmatpush2.msra.mxu0 0.0
    %97 = vmatprep.subr.mxu0 0.0
    %98 = vmatpush2.msra.mxu0 0.0
    %99 = vmatprep.subr.mxu0 0.0
    %100 = vmatpush2.msra.mxu0 0.0
    %101 = vmatprep.subr.mxu0 0.0
    %102 = vmatpush2.msra.mxu0 0.0
    %103 = vmatprep.subr.mxu0 0.0
    %104 = vmatpush2.msra.mxu0 0.0
    %105 = vmatprep.subr.mxu0 0.0
    %106 = vmatpush2.msra.mxu0 0.0
    %107 = vmatprep.subr.mxu0 0.0
    %108 = vmatpush2.msra.mxu0 0.0
    %109 = vmatprep.subr.mxu0 0.0
    %110 = vmatpush2.msra.mxu0 0.0
    %111 = vmatprep.mubr.f32.mxu0 0.0
    %v112 = vand.u32 %v44, 4294901760
    %v113 = vsub.f32 %v44, %v112
    %v114 = vand.u32 %v113, 4294901760
    %v115 = vsub.f32 %v113, %v114
    %v116 = vand.u32 %v115, 4294901760
    %117 = vmatmul.mubr.f32.gmra.mxu0 %v116
    %v118 = vpop.f32.mrf.mxu0
    %v119 = vadd.f32 0.0, %v118
    %v120 = vpop.f32.mrf.mxu0
    %121 = vdwg.mxu0
    %122 = vmatprep.subr.mxu0 0.0
    %123 = vmatpush1.msra.mxu0 0.0
    %124 = vmatprep.subr.mxu0 0.0
    %125 = vmatpush1.msra.mxu0 0.0
    %126 = vmatprep.subr.mxu0 0.0
    %127 = vmatpush1.msra.mxu0 0.0
    %128 = vmatprep.subr.mxu0 0.0
    %129 = vmatpush1.msra.mxu0 0.0
    %130 = vmatprep.subr.mxu0 0.0
    %131 = vmatpush1.msra.mxu0 0.0
    %132 = vmatprep.subr.mxu0 0.0
    %133 = vmatpush1.msra.mxu0 0.0
    %134 = vmatprep.subr.mxu0 0.0
    %135 = vmatpush1.msra.mxu0 0.0
    %136 = vmatprep.subr.mxu0 0.0
    %137 = vmatpush1.msra.mxu0 0.0
    %138 = vmatprep.subr.mxu0 0.0
    %139 = vmatpush1.msra.mxu0 0.0
    %140 = vmatprep.subr.mxu0 0.0
    %141 = vmatpush1.msra.mxu0 0.0
    %142 = vmatprep.subr.mxu0 0.0
    %143 = vmatpush1.msra.mxu0 0.0
    %144 = vmatprep.subr.mxu0 0.0
    %145 = vmatpush1.msra.mxu0 0.0
    %146 = vmatprep.subr.mxu0 0.0
    %147 = vmatpush1.msra.mxu0 0.0
    %148 = vmatprep.subr.mxu0 0.0
    %149 = vmatpush1.msra.mxu0 0.0
    %150 = vmatprep.subr.mxu0 0.0
    %151 = vmatpush1.msra.mxu0 0.0
    %152 = vmatprep.subr.mxu0 0.0
    %v153 = vand.u32 %v40, 4294901760
    %v154 = vsub.f32 %v40, %v153
    %v155 = vand.u32 %v154, 4294901760
    %v156 = vsub.f32 %v154, %v155
    %v157 = vand.u32 %v156, 4294901760
    %158 = vmatpush1.msra.mxu0 %v157
    %159 = vmatprep.subr.mxu0 0.0
    %160 = vmatpush2.msra.mxu0 0.0
    %161 = vmatprep.subr.mxu0 0.0
    %162 = vmatpush2.msra.mxu0 0.0
    %163 = vmatprep.subr.mxu0 0.0
    %164 = vmatpush2.msra.mxu0 0.0
    %165 = vmatprep.subr.mxu0 0.0
    %166 = vmatpush2.msra.mxu0 0.0
    %167 = vmatprep.subr.mxu0 0.0
    %168 = vmatpush2.msra.mxu0 0.0
    %169 = vmatprep.subr.mxu0 0.0
    %170 = vmatpush2.msra.mxu0 0.0
    %171 = vmatprep.subr.mxu0 0.0
    %172 = vmatpush2.msra.mxu0 0.0
    %173 = vmatprep.subr.mxu0 0.0
    %174 = vmatpush2.msra.mxu0 0.0
    %175 = vmatprep.subr.mxu0 0.0
    %176 = vmatpush2.msra.mxu0 0.0
    %177 = vmatprep.subr.mxu0 0.0
    %178 = vmatpush2.msra.mxu0 0.0
    %179 = vmatprep.subr.mxu0 0.0
    %180 = vmatpush2.msra.mxu0 0.0
    %181 = vmatprep.subr.mxu0 0.0
    %182 = vmatpush2.msra.mxu0 0.0
    %183 = vmatprep.subr.mxu0 0.0
    %184 = vmatpush2.msra.mxu0 0.0
    %185 = vmatprep.subr.mxu0 0.0
    %186 = vmatpush2.msra.mxu0 0.0
    %187 = vmatprep.subr.mxu0 0.0
    %188 = vmatpush2.msra.mxu0 0.0
    %189 = vmatprep.subr.mxu0 0.0
    %190 = vmatpush2.msra.mxu0 0.0
    %191 = vmatprep.mubr.f32.mxu0 0.0
    %v192 = vand.u32 %v44, 4294901760
    %193 = vmatmul.mubr.f32.gmra.mxu0 %v192
    %v194 = vpop.f32.mrf.mxu0
    %v195 = vadd.f32 %v119, %v194
    %v196 = vpop.f32.mrf.mxu0
    %197 = vdwg.mxu0
    %198 = vmatprep.subr.mxu0 0.0
    %199 = vmatpush1.msra.mxu0 0.0
    %200 = vmatprep.subr.mxu0 0.0
    %201 = vmatpush1.msra.mxu0 0.0
    %202 = vmatprep.subr.mxu0 0.0
    %203 = vmatpush1.msra.mxu0 0.0
    %204 = vmatprep.subr.mxu0 0.0
    %205 = vmatpush1.msra.mxu0 0.0
    %206 = vmatprep.subr.mxu0 0.0
    %207 = vmatpush1.msra.mxu0 0.0
    %208 = vmatprep.subr.mxu0 0.0
    %209 = vmatpush1.msra.mxu0 0.0
    %210 = vmatprep.subr.mxu0 0.0
    %211 = vmatpush1.msra.mxu0 0.0
    %212 = vmatprep.subr.mxu0 0.0
    %213 = vmatpush1.msra.mxu0 0.0
    %214 = vmatprep.subr.mxu0 0.0
    %215 = vmatpush1.msra.mxu0 0.0
    %216 = vmatprep.subr.mxu0 0.0
    %217 = vmatpush1.msra.mxu0 0.0
    %218 = vmatprep.subr.mxu0 0.0
    %219 = vmatpush1.msra.mxu0 0.0
    %220 = vmatprep.subr.mxu0 0.0
    %221 = vmatpush1.msra.mxu0 0.0
    %222 = vmatprep.subr.mxu0 0.0
    %223 = vmatpush1.msra.mxu0 0.0
    %224 = vmatprep.subr.mxu0 0.0
    %225 = vmatpush1.msra.mxu0 0.0
    %226 = vmatprep.subr.mxu0 0.0
    %227 = vmatpush1.msra.mxu0 0.0
    %228 = vmatprep.subr.mxu0 0.0
    %v229 = vand.u32 %v40, 4294901760
    %v230 = vsub.f32 %v40, %v229
    %231 = vmatpush1.msra.mxu0 %v230
    %232 = vmatprep.subr.mxu0 0.0
    %233 = vmatpush2.msra.mxu0 0.0
    %234 = vmatprep.subr.mxu0 0.0
    %235 = vmatpush2.msra.mxu0 0.0
    %236 = vmatprep.subr.mxu0 0.0
    %237 = vmatpush2.msra.mxu0 0.0
    %238 = vmatprep.subr.mxu0 0.0
    %239 = vmatpush2.msra.mxu0 0.0
    %240 = vmatprep.subr.mxu0 0.0
    %241 = vmatpush2.msra.mxu0 0.0
    %242 = vmatprep.subr.mxu0 0.0
    %243 = vmatpush2.msra.mxu0 0.0
    %244 = vmatprep.subr.mxu0 0.0
    %245 = vmatpush2.msra.mxu0 0.0
    %246 = vmatprep.subr.mxu0 0.0
    %247 = vmatpush2.msra.mxu0 0.0
    %248 = vmatprep.subr.mxu0 0.0
    %249 = vmatpush2.msra.mxu0 0.0
    %250 = vmatprep.subr.mxu0 0.0
    %251 = vmatpush2.msra.mxu0 0.0
    %252 = vmatprep.subr.mxu0 0.0
    %253 = vmatpush2.msra.mxu0 0.0
    %254 = vmatprep.subr.mxu0 0.0
    %255 = vmatpush2.msra.mxu0 0.0
    %256 = vmatprep.subr.mxu0 0.0
    %257 = vmatpush2.msra.mxu0 0.0
    %258 = vmatprep.subr.mxu0 0.0
    %259 = vmatpush2.msra.mxu0 0.0
    %260 = vmatprep.subr.mxu0 0.0
    %261 = vmatpush2.msra.mxu0 0.0
    %262 = vmatprep.subr.mxu0 0.0
    %263 = vmatpush2.msra.mxu0 0.0
    %264 = vmatprep.mubr.f32.mxu0 0.0
    %v265 = vand.u32 %v44, 4294901760
    %v266 = vsub.f32 %v44, %v265
    %267 = vmatmul.mubr.f32.gmra.mxu0 %v266
    %v268 = vpop.f32.mrf.mxu0
    %v269 = vadd.f32 %v195, %v268
    %v270 = vpop.f32.mrf.mxu0
    %271 = vdwg.mxu0
    %272 = vmatprep.subr.mxu0 0.0
    %273 = vmatpush1.msra.mxu0 0.0
    %274 = vmatprep.subr.mxu0 0.0
    %275 = vmatpush1.msra.mxu0 0.0
    %276 = vmatprep.subr.mxu0 0.0
    %277 = vmatpush1.msra.mxu0 0.0
    %278 = vmatprep.subr.mxu0 0.0
    %279 = vmatpush1.msra.mxu0 0.0
    %280 = vmatprep.subr.mxu0 0.0
    %281 = vmatpush1.msra.mxu0 0.0
    %282 = vmatprep.subr.mxu0 0.0
    %283 = vmatpush1.msra.mxu0 0.0
    %284 = vmatprep.subr.mxu0 0.0
    %285 = vmatpush1.msra.mxu0 0.0
    %286 = vmatprep.subr.mxu0 0.0
    %287 = vmatpush1.msra.mxu0 0.0
    %288 = vmatprep.subr.mxu0 0.0
    %289 = vmatpush1.msra.mxu0 0.0
    %290 = vmatprep.subr.mxu0 0.0
    %291 = vmatpush1.msra.mxu0 0.0
    %292 = vmatprep.subr.mxu0 0.0
    %293 = vmatpush1.msra.mxu0 0.0
    %294 = vmatprep.subr.mxu0 0.0
    %295 = vmatpush1.msra.mxu0 0.0
    %296 = vmatprep.subr.mxu0 0.0
    %297 = vmatpush1.msra.mxu0 0.0
    %298 = vmatprep.subr.mxu0 0.0
    %299 = vmatpush1.msra.mxu0 0.0
    %300 = vmatprep.subr.mxu0 0.0
    %301 = vmatpush1.msra.mxu0 0.0
    %302 = vmatprep.subr.mxu0 0.0
    %v303 = vand.u32 %v40, 4294901760
    %304 = vmatpush1.msra.mxu0 %v303
    %305 = vmatprep.subr.mxu0 0.0
    %306 = vmatpush2.msra.mxu0 0.0
    %307 = vmatprep.subr.mxu0 0.0
    %308 = vmatpush2.msra.mxu0 0.0
    %309 = vmatprep.subr.mxu0 0.0
    %310 = vmatpush2.msra.mxu0 0.0
    %311 = vmatprep.subr.mxu0 0.0
    %312 = vmatpush2.msra.mxu0 0.0
    %313 = vmatprep.subr.mxu0 0.0
    %314 = vmatpush2.msra.mxu0 0.0
    %315 = vmatprep.subr.mxu0 0.0
    %316 = vmatpush2.msra.mxu0 0.0
    %317 = vmatprep.subr.mxu0 0.0
    %318 = vmatpush2.msra.mxu0 0.0
    %319 = vmatprep.subr.mxu0 0.0
    %320 = vmatpush2.msra.mxu0 0.0
    %321 = vmatprep.subr.mxu0 0.0
    %322 = vmatpush2.msra.mxu0 0.0
    %323 = vmatprep.subr.mxu0 0.0
    %324 = vmatpush2.msra.mxu0 0.0
    %325 = vmatprep.subr.mxu0 0.0
    %326 = vmatpush2.msra.mxu0 0.0
    %327 = vmatprep.subr.mxu0 0.0
    %328 = vmatpush2.msra.mxu0 0.0
    %329 = vmatprep.subr.mxu0 0.0
    %330 = vmatpush2.msra.mxu0 0.0
    %331 = vmatprep.subr.mxu0 0.0
    %332 = vmatpush2.msra.mxu0 0.0
    %333 = vmatprep.subr.mxu0 0.0
    %334 = vmatpush2.msra.mxu0 0.0
    %335 = vmatprep.subr.mxu0 0.0
    %336 = vmatpush2.msra.mxu0 0.0
    %337 = vmatprep.mubr.f32.mxu0 0.0
    %v338 = vand.u32 %v44, 4294901760
    %v339 = vsub.f32 %v44, %v338
    %v340 = vand.u32 %v339, 4294901760
    %341 = vmatmul.mubr.f32.gmra.mxu0 %v340
    %v342 = vpop.f32.mrf.mxu0
    %v343 = vadd.f32 %v269, %v342
    %v344 = vpop.f32.mrf.mxu0
    %345 = vdwg.mxu0
    %346 = vmatprep.subr.mxu0 0.0
    %347 = vmatpush1.msra.mxu0 0.0
    %348 = vmatprep.subr.mxu0 0.0
    %349 = vmatpush1.msra.mxu0 0.0
    %350 = vmatprep.subr.mxu0 0.0
    %351 = vmatpush1.msra.mxu0 0.0
    %352 = vmatprep.subr.mxu0 0.0
    %353 = vmatpush1.msra.mxu0 0.0
    %354 = vmatprep.subr.mxu0 0.0
    %355 = vmatpush1.msra.mxu0 0.0
    %356 = vmatprep.subr.mxu0 0.0
    %357 = vmatpush1.msra.mxu0 0.0
    %358 = vmatprep.subr.mxu0 0.0
    %359 = vmatpush1.msra.mxu0 0.0
    %360 = vmatprep.subr.mxu0 0.0
    %361 = vmatpush1.msra.mxu0 0.0
    %362 = vmatprep.subr.mxu0 0.0
    %363 = vmatpush1.msra.mxu0 0.0
    %364 = vmatprep.subr.mxu0 0.0
    %365 = vmatpush1.msra.mxu0 0.0
    %366 = vmatprep.subr.mxu0 0.0
    %367 = vmatpush1.msra.mxu0 0.0
    %368 = vmatprep.subr.mxu0 0.0
    %369 = vmatpush1.msra.mxu0 0.0
    %370 = vmatprep.subr.mxu0 0.0
    %371 = vmatpush1.msra.mxu0 0.0
    %372 = vmatprep.subr.mxu0 0.0
    %373 = vmatpush1.msra.mxu0 0.0
    %374 = vmatprep.subr.mxu0 0.0
    %375 = vmatpush1.msra.mxu0 0.0
    %376 = vmatprep.subr.mxu0 0.0
    %v377 = vand.u32 %v40, 4294901760
    %v378 = vsub.f32 %v40, %v377
    %v379 = vand.u32 %v378, 4294901760
    %380 = vmatpush1.msra.mxu0 %v379
    %381 = vmatprep.subr.mxu0 0.0
    %382 = vmatpush2.msra.mxu0 0.0
    %383 = vmatprep.subr.mxu0 0.0
    %384 = vmatpush2.msra.mxu0 0.0
    %385 = vmatprep.subr.mxu0 0.0
    %386 = vmatpush2.msra.mxu0 0.0
    %387 = vmatprep.subr.mxu0 0.0
    %388 = vmatpush2.msra.mxu0 0.0
    %389 = vmatprep.subr.mxu0 0.0
    %390 = vmatpush2.msra.mxu0 0.0
    %391 = vmatprep.subr.mxu0 0.0
    %392 = vmatpush2.msra.mxu0 0.0
    %393 = vmatprep.subr.mxu0 0.0
    %394 = vmatpush2.msra.mxu0 0.0
    %395 = vmatprep.subr.mxu0 0.0
    %396 = vmatpush2.msra.mxu0 0.0
    %397 = vmatprep.subr.mxu0 0.0
    %398 = vmatpush2.msra.mxu0 0.0
    %399 = vmatprep.subr.mxu0 0.0
    %400 = vmatpush2.msra.mxu0 0.0
    %401 = vmatprep.subr.mxu0 0.0
    %402 = vmatpush2.msra.mxu0 0.0
    %403 = vmatprep.subr.mxu0 0.0
    %404 = vmatpush2.msra.mxu0 0.0
    %405 = vmatprep.subr.mxu0 0.0
    %406 = vmatpush2.msra.mxu0 0.0
    %407 = vmatprep.subr.mxu0 0.0
    %408 = vmatpush2.msra.mxu0 0.0
    %409 = vmatprep.subr.mxu0 0.0
    %410 = vmatpush2.msra.mxu0 0.0
    %411 = vmatprep.subr.mxu0 0.0
    %412 = vmatpush2.msra.mxu0 0.0
    %413 = vmatprep.mubr.f32.mxu0 0.0
    %v414 = vand.u32 %v44, 4294901760
    %415 = vmatmul.mubr.f32.gmra.mxu0 %v414
    %v416 = vpop.f32.mrf.mxu0
    %v417 = vadd.f32 %v343, %v416
    %v418 = vpop.f32.mrf.mxu0
    %419 = vdwg.mxu0
    %420 = vmatprep.subr.mxu0 0.0
    %421 = vmatpush1.msra.mxu0 0.0
    %422 = vmatprep.subr.mxu0 0.0
    %423 = vmatpush1.msra.mxu0 0.0
    %424 = vmatprep.subr.mxu0 0.0
    %425 = vmatpush1.msra.mxu0 0.0
    %426 = vmatprep.subr.mxu0 0.0
    %427 = vmatpush1.msra.mxu0 0.0
    %428 = vmatprep.subr.mxu0 0.0
    %429 = vmatpush1.msra.mxu0 0.0
    %430 = vmatprep.subr.mxu0 0.0
    %431 = vmatpush1.msra.mxu0 0.0
    %432 = vmatprep.subr.mxu0 0.0
    %433 = vmatpush1.msra.mxu0 0.0
    %434 = vmatprep.subr.mxu0 0.0
    %435 = vmatpush1.msra.mxu0 0.0
    %436 = vmatprep.subr.mxu0 0.0
    %437 = vmatpush1.msra.mxu0 0.0
    %438 = vmatprep.subr.mxu0 0.0
    %439 = vmatpush1.msra.mxu0 0.0
    %440 = vmatprep.subr.mxu0 0.0
    %441 = vmatpush1.msra.mxu0 0.0
    %442 = vmatprep.subr.mxu0 0.0
    %443 = vmatpush1.msra.mxu0 0.0
    %444 = vmatprep.subr.mxu0 0.0
    %445 = vmatpush1.msra.mxu0 0.0
    %446 = vmatprep.subr.mxu0 0.0
    %447 = vmatpush1.msra.mxu0 0.0
    %448 = vmatprep.subr.mxu0 0.0
    %449 = vmatpush1.msra.mxu0 0.0
    %450 = vmatprep.subr.mxu0 0.0
    %v451 = vand.u32 %v40, 4294901760
    %452 = vmatpush1.msra.mxu0 %v451
    %453 = vmatprep.subr.mxu0 0.0
    %454 = vmatpush2.msra.mxu0 0.0
    %455 = vmatprep.subr.mxu0 0.0
    %456 = vmatpush2.msra.mxu0 0.0
    %457 = vmatprep.subr.mxu0 0.0
    %458 = vmatpush2.msra.mxu0 0.0
    %459 = vmatprep.subr.mxu0 0.0
    %460 = vmatpush2.msra.mxu0 0.0
    %461 = vmatprep.subr.mxu0 0.0
    %462 = vmatpush2.msra.mxu0 0.0
    %463 = vmatprep.subr.mxu0 0.0
    %464 = vmatpush2.msra.mxu0 0.0
    %465 = vmatprep.subr.mxu0 0.0
    %466 = vmatpush2.msra.mxu0 0.0
    %467 = vmatprep.subr.mxu0 0.0
    %468 = vmatpush2.msra.mxu0 0.0
    %469 = vmatprep.subr.mxu0 0.0
    %470 = vmatpush2.msra.mxu0 0.0
    %471 = vmatprep.subr.mxu0 0.0
    %472 = vmatpush2.msra.mxu0 0.0
    %473 = vmatprep.subr.mxu0 0.0
    %474 = vmatpush2.msra.mxu0 0.0
    %475 = vmatprep.subr.mxu0 0.0
    %476 = vmatpush2.msra.mxu0 0.0
    %477 = vmatprep.subr.mxu0 0.0
    %478 = vmatpush2.msra.mxu0 0.0
    %479 = vmatprep.subr.mxu0 0.0
    %480 = vmatpush2.msra.mxu0 0.0
    %481 = vmatprep.subr.mxu0 0.0
    %482 = vmatpush2.msra.mxu0 0.0
    %483 = vmatprep.subr.mxu0 0.0
    %484 = vmatpush2.msra.mxu0 0.0
    %485 = vmatprep.mubr.f32.mxu0 0.0
    %v486 = vand.u32 %v44, 4294901760
    %487 = vmatmul.mubr.f32.gmra.mxu0 %v486
    %v488 = vpop.f32.mrf.mxu0
    %v489 = vadd.f32 %v417, %v488
    %v490 = vpop.f32.mrf.mxu0
    %491 = vdwg.mxu0
    %v493 = vsel %vm42, %v39, 0
    %495 = vmatprep.subr.mxu0 0.0
    %496 = vmatpush1.msra.mxu0 0.0
    %497 = vmatprep.subr.mxu0 0.0
    %498 = vmatpush1.msra.mxu0 0.0
    %499 = vmatprep.subr.mxu0 0.0
    %500 = vmatpush1.msra.mxu0 0.0
    %501 = vmatprep.subr.mxu0 0.0
    %502 = vmatpush1.msra.mxu0 0.0
    %503 = vmatprep.subr.mxu0 0.0
    %504 = vmatpush1.msra.mxu0 0.0
    %505 = vmatprep.subr.mxu0 0.0
    %506 = vmatpush1.msra.mxu0 0.0
    %507 = vmatprep.subr.mxu0 0.0
    %508 = vmatpush1.msra.mxu0 0.0
    %509 = vmatprep.subr.mxu0 0.0
    %510 = vmatpush1.msra.mxu0 0.0
    %511 = vmatprep.subr.mxu0 0.0
    %512 = vmatpush1.msra.mxu0 0.0
    %513 = vmatprep.subr.mxu0 0.0
    %514 = vmatpush1.msra.mxu0 0.0
    %515 = vmatprep.subr.mxu0 0.0
    %516 = vmatpush1.msra.mxu0 0.0
    %517 = vmatprep.subr.mxu0 0.0
    %518 = vmatpush1.msra.mxu0 0.0
    %519 = vmatprep.subr.mxu0 0.0
    %520 = vmatpush1.msra.mxu0 0.0
    %521 = vmatprep.subr.mxu0 0.0
    %522 = vmatpush1.msra.mxu0 0.0
    %523 = vmatprep.subr.mxu0 0.0
    %524 = vmatpush1.msra.mxu0 0.0
    %525 = vmatprep.subr.mxu0 0.0
    %v526 = vand.u32 %v41, 4294901760
    %527 = vmatpush1.msra.mxu0 %v526
    %528 = vmatprep.subr.mxu0 0.0
    %529 = vmatpush2.msra.mxu0 0.0
    %530 = vmatprep.subr.mxu0 0.0
    %531 = vmatpush2.msra.mxu0 0.0
    %532 = vmatprep.subr.mxu0 0.0
    %533 = vmatpush2.msra.mxu0 0.0
    %534 = vmatprep.subr.mxu0 0.0
    %535 = vmatpush2.msra.mxu0 0.0
    %536 = vmatprep.subr.mxu0 0.0
    %537 = vmatpush2.msra.mxu0 0.0
    %538 = vmatprep.subr.mxu0 0.0
    %539 = vmatpush2.msra.mxu0 0.0
    %540 = vmatprep.subr.mxu0 0.0
    %541 = vmatpush2.msra.mxu0 0.0
    %542 = vmatprep.subr.mxu0 0.0
    %543 = vmatpush2.msra.mxu0 0.0
    %544 = vmatprep.subr.mxu0 0.0
    %545 = vmatpush2.msra.mxu0 0.0
    %546 = vmatprep.subr.mxu0 0.0
    %547 = vmatpush2.msra.mxu0 0.0
    %548 = vmatprep.subr.mxu0 0.0
    %549 = vmatpush2.msra.mxu0 0.0
    %550 = vmatprep.subr.mxu0 0.0
    %551 = vmatpush2.msra.mxu0 0.0
    %552 = vmatprep.subr.mxu0 0.0
    %553 = vmatpush2.msra.mxu0 0.0
    %554 = vmatprep.subr.mxu0 0.0
    %555 = vmatpush2.msra.mxu0 0.0
    %556 = vmatprep.subr.mxu0 0.0
    %557 = vmatpush2.msra.mxu0 0.0
    %558 = vmatprep.subr.mxu0 0.0
    %559 = vmatpush2.msra.mxu0 0.0
    %560 = vmatprep.mubr.f32.mxu0 0.0
    %v561 = vand.u32 %v493, 4294901760
    %v562 = vsub.f32 %v493, %v561
    %v563 = vand.u32 %v562, 4294901760
    %v564 = vsub.f32 %v562, %v563
    %v565 = vand.u32 %v564, 4294901760
    %566 = vmatmul.mubr.f32.gmra.mxu0 %v565
    %v567 = vpop.f32.mrf.mxu0
    %v568 = vadd.f32 0.0, %v567
    %v569 = vpop.f32.mrf.mxu0
    %570 = vdwg.mxu0
    %571 = vmatprep.subr.mxu0 0.0
    %572 = vmatpush1.msra.mxu0 0.0
    %573 = vmatprep.subr.mxu0 0.0
    %574 = vmatpush1.msra.mxu0 0.0
    %575 = vmatprep.subr.mxu0 0.0
    %576 = vmatpush1.msra.mxu0 0.0
    %577 = vmatprep.subr.mxu0 0.0
    %578 = vmatpush1.msra.mxu0 0.0
    %579 = vmatprep.subr.mxu0 0.0
    %580 = vmatpush1.msra.mxu0 0.0
    %581 = vmatprep.subr.mxu0 0.0
    %582 = vmatpush1.msra.mxu0 0.0
    %583 = vmatprep.subr.mxu0 0.0
    %584 = vmatpush1.msra.mxu0 0.0
    %585 = vmatprep.subr.mxu0 0.0
    %586 = vmatpush1.msra.mxu0 0.0
    %587 = vmatprep.subr.mxu0 0.0
    %588 = vmatpush1.msra.mxu0 0.0
    %589 = vmatprep.subr.mxu0 0.0
    %590 = vmatpush1.msra.mxu0 0.0
    %591 = vmatprep.subr.mxu0 0.0
    %592 = vmatpush1.msra.mxu0 0.0
    %593 = vmatprep.subr.mxu0 0.0
    %594 = vmatpush1.msra.mxu0 0.0
    %595 = vmatprep.subr.mxu0 0.0
    %596 = vmatpush1.msra.mxu0 0.0
    %597 = vmatprep.subr.mxu0 0.0
    %598 = vmatpush1.msra.mxu0 0.0
    %599 = vmatprep.subr.mxu0 0.0
    %600 = vmatpush1.msra.mxu0 0.0
    %601 = vmatprep.subr.mxu0 0.0
    %v602 = vand.u32 %v41, 4294901760
    %v603 = vsub.f32 %v41, %v602
    %v604 = vand.u32 %v603, 4294901760
    %v605 = vsub.f32 %v603, %v604
    %v606 = vand.u32 %v605, 4294901760
    %607 = vmatpush1.msra.mxu0 %v606
    %608 = vmatprep.subr.mxu0 0.0
    %609 = vmatpush2.msra.mxu0 0.0
    %610 = vmatprep.subr.mxu0 0.0
    %611 = vmatpush2.msra.mxu0 0.0
    %612 = vmatprep.subr.mxu0 0.0
    %613 = vmatpush2.msra.mxu0 0.0
    %614 = vmatprep.subr.mxu0 0.0
    %615 = vmatpush2.msra.mxu0 0.0
    %616 = vmatprep.subr.mxu0 0.0
    %617 = vmatpush2.msra.mxu0 0.0
    %618 = vmatprep.subr.mxu0 0.0
    %619 = vmatpush2.msra.mxu0 0.0
    %620 = vmatprep.subr.mxu0 0.0
    %621 = vmatpush2.msra.mxu0 0.0
    %622 = vmatprep.subr.mxu0 0.0
    %623 = vmatpush2.msra.mxu0 0.0
    %624 = vmatprep.subr.mxu0 0.0
    %625 = vmatpush2.msra.mxu0 0.0
    %626 = vmatprep.subr.mxu0 0.0
    %627 = vmatpush2.msra.mxu0 0.0
    %628 = vmatprep.subr.mxu0 0.0
    %629 = vmatpush2.msra.mxu0 0.0
    %630 = vmatprep.subr.mxu0 0.0
    %631 = vmatpush2.msra.mxu0 0.0
    %632 = vmatprep.subr.mxu0 0.0
    %633 = vmatpush2.msra.mxu0 0.0
    %634 = vmatprep.subr.mxu0 0.0
    %635 = vmatpush2.msra.mxu0 0.0
    %636 = vmatprep.subr.mxu0 0.0
    %637 = vmatpush2.msra.mxu0 0.0
    %638 = vmatprep.subr.mxu0 0.0
    %639 = vmatpush2.msra.mxu0 0.0
    %640 = vmatprep.mubr.f32.mxu0 0.0
    %v641 = vand.u32 %v493, 4294901760
    %642 = vmatmul.mubr.f32.gmra.mxu0 %v641
    %v643 = vpop.f32.mrf.mxu0
    %v644 = vadd.f32 %v568, %v643
    %v645 = vpop.f32.mrf.mxu0
    %646 = vdwg.mxu0
    %647 = vmatprep.subr.mxu0 0.0
    %648 = vmatpush1.msra.mxu0 0.0
    %649 = vmatprep.subr.mxu0 0.0
    %650 = vmatpush1.msra.mxu0 0.0
    %651 = vmatprep.subr.mxu0 0.0
    %652 = vmatpush1.msra.mxu0 0.0
    %653 = vmatprep.subr.mxu0 0.0
    %654 = vmatpush1.msra.mxu0 0.0
    %655 = vmatprep.subr.mxu0 0.0
    %656 = vmatpush1.msra.mxu0 0.0
    %657 = vmatprep.subr.mxu0 0.0
    %658 = vmatpush1.msra.mxu0 0.0
    %659 = vmatprep.subr.mxu0 0.0
    %660 = vmatpush1.msra.mxu0 0.0
    %661 = vmatprep.subr.mxu0 0.0
    %662 = vmatpush1.msra.mxu0 0.0
    %663 = vmatprep.subr.mxu0 0.0
    %664 = vmatpush1.msra.mxu0 0.0
    %665 = vmatprep.subr.mxu0 0.0
    %666 = vmatpush1.msra.mxu0 0.0
    %667 = vmatprep.subr.mxu0 0.0
    %668 = vmatpush1.msra.mxu0 0.0
    %669 = vmatprep.subr.mxu0 0.0
    %670 = vmatpush1.msra.mxu0 0.0
    %671 = vmatprep.subr.mxu0 0.0
    %672 = vmatpush1.msra.mxu0 0.0
    %673 = vmatprep.subr.mxu0 0.0
    %674 = vmatpush1.msra.mxu0 0.0
    %675 = vmatprep.subr.mxu0 0.0
    %676 = vmatpush1.msra.mxu0 0.0
    %677 = vmatprep.subr.mxu0 0.0
    %v678 = vand.u32 %v41, 4294901760
    %v679 = vsub.f32 %v41, %v678
    %680 = vmatpush1.msra.mxu0 %v679
    %681 = vmatprep.subr.mxu0 0.0
    %682 = vmatpush2.msra.mxu0 0.0
    %683 = vmatprep.subr.mxu0 0.0
    %684 = vmatpush2.msra.mxu0 0.0
    %685 = vmatprep.subr.mxu0 0.0
    %686 = vmatpush2.msra.mxu0 0.0
    %687 = vmatprep.subr.mxu0 0.0
    %688 = vmatpush2.msra.mxu0 0.0
    %689 = vmatprep.subr.mxu0 0.0
    %690 = vmatpush2.msra.mxu0 0.0
    %691 = vmatprep.subr.mxu0 0.0
    %692 = vmatpush2.msra.mxu0 0.0
    %693 = vmatprep.subr.mxu0 0.0
    %694 = vmatpush2.msra.mxu0 0.0
    %695 = vmatprep.subr.mxu0 0.0
    %696 = vmatpush2.msra.mxu0 0.0
    %697 = vmatprep.subr.mxu0 0.0
    %698 = vmatpush2.msra.mxu0 0.0
    %699 = vmatprep.subr.mxu0 0.0
    %700 = vmatpush2.msra.mxu0 0.0
    %701 = vmatprep.subr.mxu0 0.0
    %702 = vmatpush2.msra.mxu0 0.0
    %703 = vmatprep.subr.mxu0 0.0
    %704 = vmatpush2.msra.mxu0 0.0
    %705 = vmatprep.subr.mxu0 0.0
    %706 = vmatpush2.msra.mxu0 0.0
    %707 = vmatprep.subr.mxu0 0.0
    %708 = vmatpush2.msra.mxu0 0.0
    %709 = vmatprep.subr.mxu0 0.0
    %710 = vmatpush2.msra.mxu0 0.0
    %711 = vmatprep.subr.mxu0 0.0
    %712 = vmatpush2.msra.mxu0 0.0
    %713 = vmatprep.mubr.f32.mxu0 0.0
    %v714 = vand.u32 %v493, 4294901760
    %v715 = vsub.f32 %v493, %v714
    %716 = vmatmul.mubr.f32.gmra.mxu0 %v715
    %v717 = vpop.f32.mrf.mxu0
    %v718 = vadd.f32 %v644, %v717
    %v719 = vpop.f32.mrf.mxu0
    %720 = vdwg.mxu0
    %721 = vmatprep.subr.mxu0 0.0
    %722 = vmatpush1.msra.mxu0 0.0
    %723 = vmatprep.subr.mxu0 0.0
    %724 = vmatpush1.msra.mxu0 0.0
    %725 = vmatprep.subr.mxu0 0.0
    %726 = vmatpush1.msra.mxu0 0.0
    %727 = vmatprep.subr.mxu0 0.0
    %728 = vmatpush1.msra.mxu0 0.0
    %729 = vmatprep.subr.mxu0 0.0
    %730 = vmatpush1.msra.mxu0 0.0
    %731 = vmatprep.subr.mxu0 0.0
    %732 = vmatpush1.msra.mxu0 0.0
    %733 = vmatprep.subr.mxu0 0.0
    %734 = vmatpush1.msra.mxu0 0.0
    %735 = vmatprep.subr.mxu0 0.0
    %736 = vmatpush1.msra.mxu0 0.0
    %737 = vmatprep.subr.mxu0 0.0
    %738 = vmatpush1.msra.mxu0 0.0
    %739 = vmatprep.subr.mxu0 0.0
    %740 = vmatpush1.msra.mxu0 0.0
    %741 = vmatprep.subr.mxu0 0.0
    %742 = vmatpush1.msra.mxu0 0.0
    %743 = vmatprep.subr.mxu0 0.0
    %744 = vmatpush1.msra.mxu0 0.0
    %745 = vmatprep.subr.mxu0 0.0
    %746 = vmatpush1.msra.mxu0 0.0
    %747 = vmatprep.subr.mxu0 0.0
    %748 = vmatpush1.msra.mxu0 0.0
    %749 = vmatprep.subr.mxu0 0.0
    %750 = vmatpush1.msra.mxu0 0.0
    %751 = vmatprep.subr.mxu0 0.0
    %v752 = vand.u32 %v41, 4294901760
    %753 = vmatpush1.msra.mxu0 %v752
    %754 = vmatprep.subr.mxu0 0.0
    %755 = vmatpush2.msra.mxu0 0.0
    %756 = vmatprep.subr.mxu0 0.0
    %757 = vmatpush2.msra.mxu0 0.0
    %758 = vmatprep.subr.mxu0 0.0
    %759 = vmatpush2.msra.mxu0 0.0
    %760 = vmatprep.subr.mxu0 0.0
    %761 = vmatpush2.msra.mxu0 0.0
    %762 = vmatprep.subr.mxu0 0.0
    %763 = vmatpush2.msra.mxu0 0.0
    %764 = vmatprep.subr.mxu0 0.0
    %765 = vmatpush2.msra.mxu0 0.0
    %766 = vmatprep.subr.mxu0 0.0
    %767 = vmatpush2.msra.mxu0 0.0
    %768 = vmatprep.subr.mxu0 0.0
    %769 = vmatpush2.msra.mxu0 0.0
    %770 = vmatprep.subr.mxu0 0.0
    %771 = vmatpush2.msra.mxu0 0.0
    %772 = vmatprep.subr.mxu0 0.0
    %773 = vmatpush2.msra.mxu0 0.0
    %774 = vmatprep.subr.mxu0 0.0
    %775 = vmatpush2.msra.mxu0 0.0
    %776 = vmatprep.subr.mxu0 0.0
    %777 = vmatpush2.msra.mxu0 0.0
    %778 = vmatprep.subr.mxu0 0.0
    %779 = vmatpush2.msra.mxu0 0.0
    %780 = vmatprep.subr.mxu0 0.0
    %781 = vmatpush2.msra.mxu0 0.0
    %782 = vmatprep.subr.mxu0 0.0
    %783 = vmatpush2.msra.mxu0 0.0
    %784 = vmatprep.subr.mxu0 0.0
    %785 = vmatpush2.msra.mxu0 0.0
    %786 = vmatprep.mubr.f32.mxu0 0.0
    %v787 = vand.u32 %v493, 4294901760
    %v788 = vsub.f32 %v493, %v787
    %v789 = vand.u32 %v788, 4294901760
    %790 = vmatmul.mubr.f32.gmra.mxu0 %v789
    %v791 = vpop.f32.mrf.mxu0
    %v792 = vadd.f32 %v718, %v791
    %v793 = vpop.f32.mrf.mxu0
    %794 = vdwg.mxu0
    %795 = vmatprep.subr.mxu0 0.0
    %796 = vmatpush1.msra.mxu0 0.0
    %797 = vmatprep.subr.mxu0 0.0
    %798 = vmatpush1.msra.mxu0 0.0
    %799 = vmatprep.subr.mxu0 0.0
    %800 = vmatpush1.msra.mxu0 0.0
    %801 = vmatprep.subr.mxu0 0.0
    %802 = vmatpush1.msra.mxu0 0.0
    %803 = vmatprep.subr.mxu0 0.0
    %804 = vmatpush1.msra.mxu0 0.0
    %805 = vmatprep.subr.mxu0 0.0
    %806 = vmatpush1.msra.mxu0 0.0
    %807 = vmatprep.subr.mxu0 0.0
    %808 = vmatpush1.msra.mxu0 0.0
    %809 = vmatprep.subr.mxu0 0.0
    %810 = vmatpush1.msra.mxu0 0.0
    %811 = vmatprep.subr.mxu0 0.0
    %812 = vmatpush1.msra.mxu0 0.0
    %813 = vmatprep.subr.mxu0 0.0
    %814 = vmatpush1.msra.mxu0 0.0
    %815 = vmatprep.subr.mxu0 0.0
    %816 = vmatpush1.msra.mxu0 0.0
    %817 = vmatprep.subr.mxu0 0.0
    %818 = vmatpush1.msra.mxu0 0.0
    %819 = vmatprep.subr.mxu0 0.0
    %820 = vmatpush1.msra.mxu0 0.0
    %821 = vmatprep.subr.mxu0 0.0
    %822 = vmatpush1.msra.mxu0 0.0
    %823 = vmatprep.subr.mxu0 0.0
    %824 = vmatpush1.msra.mxu0 0.0
    %825 = vmatprep.subr.mxu0 0.0
    %v826 = vand.u32 %v41, 4294901760
    %v827 = vsub.f32 %v41, %v826
    %v828 = vand.u32 %v827, 4294901760
    %829 = vmatpush1.msra.mxu0 %v828
    %830 = vmatprep.subr.mxu0 0.0
    %831 = vmatpush2.msra.mxu0 0.0
    %832 = vmatprep.subr.mxu0 0.0
    %833 = vmatpush2.msra.mxu0 0.0
    %834 = vmatprep.subr.mxu0 0.0
    %835 = vmatpush2.msra.mxu0 0.0
    %836 = vmatprep.subr.mxu0 0.0
    %837 = vmatpush2.msra.mxu0 0.0
    %838 = vmatprep.subr.mxu0 0.0
    %839 = vmatpush2.msra.mxu0 0.0
    %840 = vmatprep.subr.mxu0 0.0
    %841 = vmatpush2.msra.mxu0 0.0
    %842 = vmatprep.subr.mxu0 0.0
    %843 = vmatpush2.msra.mxu0 0.0
    %844 = vmatprep.subr.mxu0 0.0
    %845 = vmatpush2.msra.mxu0 0.0
    %846 = vmatprep.subr.mxu0 0.0
    %847 = vmatpush2.msra.mxu0 0.0
    %848 = vmatprep.subr.mxu0 0.0
    %849 = vmatpush2.msra.mxu0 0.0
    %850 = vmatprep.subr.mxu0 0.0
    %851 = vmatpush2.msra.mxu0 0.0
    %852 = vmatprep.subr.mxu0 0.0
    %853 = vmatpush2.msra.mxu0 0.0
    %854 = vmatprep.subr.mxu0 0.0
    %855 = vmatpush2.msra.mxu0 0.0
    %856 = vmatprep.subr.mxu0 0.0
    %857 = vmatpush2.msra.mxu0 0.0
    %858 = vmatprep.subr.mxu0 0.0
    %859 = vmatpush2.msra.mxu0 0.0
    %860 = vmatprep.subr.mxu0 0.0
    %861 = vmatpush2.msra.mxu0 0.0
    %862 = vmatprep.mubr.f32.mxu0 0.0
    %v863 = vand.u32 %v493, 4294901760
    %864 = vmatmul.mubr.f32.gmra.mxu0 %v863
    %v865 = vpop.f32.mrf.mxu0
    %v866 = vadd.f32 %v792, %v865
    %v867 = vpop.f32.mrf.mxu0
    %868 = vdwg.mxu0
    %869 = vmatprep.subr.mxu0 0.0
    %870 = vmatpush1.msra.mxu0 0.0
    %871 = vmatprep.subr.mxu0 0.0
    %872 = vmatpush1.msra.mxu0 0.0
    %873 = vmatprep.subr.mxu0 0.0
    %874 = vmatpush1.msra.mxu0 0.0
    %875 = vmatprep.subr.mxu0 0.0
    %876 = vmatpush1.msra.mxu0 0.0
    %877 = vmatprep.subr.mxu0 0.0
    %878 = vmatpush1.msra.mxu0 0.0
    %879 = vmatprep.subr.mxu0 0.0
    %880 = vmatpush1.msra.mxu0 0.0
    %881 = vmatprep.subr.mxu0 0.0
    %882 = vmatpush1.msra.mxu0 0.0
    %883 = vmatprep.subr.mxu0 0.0
    %884 = vmatpush1.msra.mxu0 0.0
    %885 = vmatprep.subr.mxu0 0.0
    %886 = vmatpush1.msra.mxu0 0.0
    %887 = vmatprep.subr.mxu0 0.0
    %888 = vmatpush1.msra.mxu0 0.0
    %889 = vmatprep.subr.mxu0 0.0
    %890 = vmatpush1.msra.mxu0 0.0
    %891 = vmatprep.subr.mxu0 0.0
    %892 = vmatpush1.msra.mxu0 0.0
    %893 = vmatprep.subr.mxu0 0.0
    %894 = vmatpush1.msra.mxu0 0.0
    %895 = vmatprep.subr.mxu0 0.0
    %896 = vmatpush1.msra.mxu0 0.0
    %897 = vmatprep.subr.mxu0 0.0
    %898 = vmatpush1.msra.mxu0 0.0
    %899 = vmatprep.subr.mxu0 0.0
    %v900 = vand.u32 %v41, 4294901760
    %901 = vmatpush1.msra.mxu0 %v900
    %902 = vmatprep.subr.mxu0 0.0
    %903 = vmatpush2.msra.mxu0 0.0
    %904 = vmatprep.subr.mxu0 0.0
    %905 = vmatpush2.msra.mxu0 0.0
    %906 = vmatprep.subr.mxu0 0.0
    %907 = vmatpush2.msra.mxu0 0.0
    %908 = vmatprep.subr.mxu0 0.0
    %909 = vmatpush2.msra.mxu0 0.0
    %910 = vmatprep.subr.mxu0 0.0
    %911 = vmatpush2.msra.mxu0 0.0
    %912 = vmatprep.subr.mxu0 0.0
    %913 = vmatpush2.msra.mxu0 0.0
    %914 = vmatprep.subr.mxu0 0.0
    %915 = vmatpush2.msra.mxu0 0.0
    %916 = vmatprep.subr.mxu0 0.0
    %917 = vmatpush2.msra.mxu0 0.0
    %918 = vmatprep.subr.mxu0 0.0
    %919 = vmatpush2.msra.mxu0 0.0
    %920 = vmatprep.subr.mxu0 0.0
    %921 = vmatpush2.msra.mxu0 0.0
    %922 = vmatprep.subr.mxu0 0.0
    %923 = vmatpush2.msra.mxu0 0.0
    %924 = vmatprep.subr.mxu0 0.0
    %925 = vmatpush2.msra.mxu0 0.0
    %926 = vmatprep.subr.mxu0 0.0
    %927 = vmatpush2.msra.mxu0 0.0
    %928 = vmatprep.subr.mxu0 0.0
    %929 = vmatpush2.msra.mxu0 0.0
    %930 = vmatprep.subr.mxu0 0.0
    %931 = vmatpush2.msra.mxu0 0.0
    %932 = vmatprep.subr.mxu0 0.0
    %933 = vmatpush2.msra.mxu0 0.0
    %934 = vmatprep.mubr.f32.mxu0 0.0
    %v935 = vand.u32 %v493, 4294901760
    %936 = vmatmul.mubr.f32.gmra.mxu0 %v935
    %v937 = vpop.f32.mrf.mxu0
    %v938 = vadd.f32 %v866, %v937
    %v939 = vpop.f32.mrf.mxu0
    %940 = vdwg.mxu0
    %v941 = vadd.f32 %v36, %v489
    %v942 = vadd.f32 %v37, %v938
    %vm943 = vcmask 253952
    %944 = vst.msk [vmem:[#allocation2] sm:$0x1] %vm943, %v941
    %945 = vst.msk [vmem:[#allocation2 + $0x1] sm:$0x1] %vm943, %v942
    // Predicated region
    $region22: #{encoder_forward.1} parent=1 // pred_check
      %p946 = pneg %p29
    $region23: #{encoder_forward.1} parent=1 // pred_check_branch
      %948 = sbr.rel (%p946) target = $region25
    $region24: #{encoder_forward.1} parent=1 // pred_region
      %v949 = vld [vmem:[#allocation2] sm:$0x1]
      %v950 = vld [vmem:[#allocation2 + $0x1] sm:$0x1]
      %v951 = vld [vmem:[%s2] sm:$0x1]
      %v952 = vld [vmem:[%s2 + $0x1] sm:$0x1]
      %954 = vset.pattern.permute.xlu0 0
      %955 = vperm.xlu0 %954, %v951
      %v956 = vpop.permute.xlu0 %955
      %v958 = vlaneseq
      %v959 = vshrl.u32 %v958, 7
      %v960 = vsub.s32 0, %v959
      %v961 = vrot.slane %v956, %v960
      %963 = vset.pattern.permute.xlu0 0
      %964 = vperm.xlu0 %963, %v952
      %v965 = vpop.permute.xlu0 %964
      %v967 = vlaneseq
      %v968 = vshrl.u32 %v967, 7
      %v969 = vsub.s32 0, %v968
      %v970 = vrot.slane %v965, %v969
      %v971 = vmul.f32 %v949, %v961
      %v972 = vmul.f32 %v950, %v970
      %973 = vst.msk [vmem:[#allocation6] sm:$0x1] %vm943, %v971
      %974 = vst.msk [vmem:[#allocation6 + $0x1] sm:$0x1] %vm943, %v972
    $region25: #{encoder_forward.1} parent=1 // pred_fallthru
      _
    // Predicated region
    $region26: #{encoder_forward.1} parent=1 // pred_check
      _
    $region27: #{encoder_forward.1} parent=1 // pred_check_branch
      %976 = sbr.rel (0) target = $region29
    $region28: #{encoder_forward.1} parent=1 // pred_region
      %s978 = ssub.s32 32, 32
      %979 = vsyncadd [#allocation5], %s978
      %s980 = sshll.u32 [#allocation6], 4
      %s981 = int_to_ptr.vmem [resolvable:$true] %s980
      %986 = dma.vmem_to_hbm [thread:$0]  %s981, 32, %s3, [#allocation5], 16, 16, 1
    $region29: #{encoder_forward.1} parent=1 // pred_fallthru
      _
    // Predicated region
    $region30: #{encoder_forward.1} parent=1 // pred_check
      _
    $region31: #{encoder_forward.1} parent=1 // pred_check_branch
      %988 = sbr.rel (0) target = $region33
    $region32: #{encoder_forward.1} parent=1 // pred_region
      %989 = dma.done [#allocation5], 32
    $region33: #{encoder_forward.1} parent=1 // pred_fallthru
      _
    %990 = vsyncpa [#allocation4], 1
    %991 = vsyncpa [#allocation5], 1

</llo_original>
